<compile_context>
chip_gen: v7x
topology: tpu7x:2x2x1
jax: 0.10.0
libtpu: 0.0.40
codegen_flags: <defaults>
</compile_context>

<pallas_src>
import functools

import jax
import jax.numpy as jnp
from jax.experimental import pallas as pl
from jax.experimental.pallas import tpu as pltpu


# --------------------------- tiling / budget helpers --------------------------


def _round_up(v, m):
    return ((v + m - 1) // m) * m


def _largest_tile(n_pad, cap):
    """Largest multiple of 128 that divides n_pad and is <= cap (never below 128)."""
    k = n_pad // 128
    best = 128
    for m in range(1, k + 1):
        t = 128 * m
        if k % m == 0 and t <= cap:
            best = t
    return best


def _tpu_generation_budget():
    """(max destination tile, scoped-VMEM budget bytes) — generation aware."""
    vmem_cap = 64 * 1024 * 1024                      # conservative default (v7x class)
    try:
        cap = getattr(pltpu.get_tpu_info(), "vmem_capacity_bytes", None)
        if cap:
            vmem_cap = int(cap)
    except Exception:                                # noqa: BLE001 - fall back safely
        pass
    if vmem_cap >= 100 * 1024 * 1024:                # v5e / v6e: 128 MiB physical VMEM
        return 512, 96 * 1024 * 1024
    return 256, 48 * 1024 * 1024                     # v7x: 64 MiB physical VMEM per TC


def _attention_footprint(tile, n_pad, heads, f_out, d_out, nsq_bytes):
    """Rough per-step VMEM bytes of the attention kernel (used to pick the tile)."""
    adj = 2 * tile * n_pad                           # int8 adjacency tile (double-buffered)
    haug = n_pad * heads * (f_out + 1) * nsq_bytes   # grid-invariant h_aug (single-buffered)
    ssrc = 4 * n_pad * heads                         # grid-invariant source scores
    small = 2 * 4 * tile * (heads + d_out)           # dest-score + output tiles
    temps = 3 * 4 * tile * n_pad                     # live [tile, N] f32 slabs (mask/e/p)
    return adj + haug + ssrc + small + temps


# ----------------------- single-buffering support probe -----------------------


def _probe_kernel(x_ref, o_ref):
    o_ref[...] = x_ref[...]


@functools.lru_cache(maxsize=None)
def _single_buffering_supported():
    """True iff this JAX/Mosaic build accepts pipeline_mode=pl.Buffered(1)."""
    if not hasattr(pl, "Buffered"):
        return False
    try:
        fn = pl.pallas_call(
            _probe_kernel,
            out_shape=jax.ShapeDtypeStruct((8, 128), jnp.float32),
            grid=(1,),
            in_specs=[pl.BlockSpec((8, 128), lambda i: (0, 0),
                                   pipeline_mode=pl.Buffered(1))],
            out_specs=pl.BlockSpec((8, 128), lambda i: (0, 0)),
        )
        jax.block_until_ready(fn(jnp.zeros((8, 128), jnp.float32)))
        return True
    except Exception:                                # noqa: BLE001 - any failure -> fallback
        return False


def _invariant_spec(block_shape, index_map):
    """BlockSpec for grid-invariant inputs: single-buffer them when supported."""
    if _single_buffering_supported():
        return pl.BlockSpec(block_shape, index_map, pipeline_mode=pl.Buffered(1))
    return pl.BlockSpec(block_shape, index_map)


# ----------------------------- parameter folding ------------------------------


def _fuse_head_weights(w):
    # w: [H, Fin, F] -> [Fin, H*F]  (one wide MXU matmul instead of H tiny ones)
    h, fin, f = w.shape
    return jnp.transpose(w, (1, 0, 2)).reshape(fin, h * f)


def _extended_weights(w, att_src, att_dst):
    """W_ext = [W_all | W_all·a_src | W_all·a_dst]  of shape [Fin, H*F + 2H].

    Folds the per-head attention-score projections into the feature matmul so the
    transform kernel needs a single MXU push per tile.
    """
    w_all = _fuse_head_weights(w)                                   # [Fin, H*F]
    w_src = jnp.einsum("hif,hf->ih", w, att_src[:, 0, :], precision="highest")  # [Fin, H]
    w_dst = jnp.einsum("hif,hf->ih", w, att_dst[:, 0, :], precision="highest")  # [Fin, H]
    return jnp.concatenate([w_all, w_src, w_dst], axis=1)


# ----------------------------- Pallas kernels ---------------------------------


def _gat_transform_kernel(x_ref, w_ref, h_ref):
    """h_ext = x @ W_ext : per-head features + both attention projections, one matmul."""
    h_ref[...] = jnp.dot(x_ref[...], w_ref[...], preferred_element_type=jnp.float32)


def _gat_attention_kernel(adj_ref, haug_ref, ssrc_ref, sdst_ref, bias_ref, out_ref,
                          *, heads, f_out, concat, apply_elu, apply_log_softmax,
                          approx_recip):
    """Masked softmax attention + aggregation for one tile of destination rows."""
    neg = jnp.float32(-1e30)
    # int8 adjacency tile -> additive mask bias, computed ONCE per tile.
    add_mask = jnp.where(adj_ref[...] > 0, jnp.float32(0.0), neg)       # [T, Ns]
    fp1 = f_out + 1

    outs = []
    acc = None
    for hd in range(heads):
        # e[i, j] = a_dst·h_i + a_src·h_j  (broadcast [T,1] + [1,Ns])
        e = sdst_ref[:, hd:hd + 1] + ssrc_ref[hd:hd + 1, :]              # [T, Ns]
        e = jnp.maximum(e, 0.2 * e)                                      # LeakyReLU(0.2)
        e = e + add_mask                                                 # mask non-edges
        e = e - jnp.max(e, axis=1, keepdims=True)                        # stable softmax
        p = jnp.exp(e).astype(haug_ref.dtype)                            # f32 exp, masked -> 0

        # One matmul gives the aggregation AND (via the baked ones column) row-sum(p).
        agg_ext = jnp.dot(p, haug_ref[:, hd * fp1:(hd + 1) * fp1],
                          preferred_element_type=jnp.float32)            # [T, F+1]
        inv = pl.reciprocal(agg_ext[:, f_out:f_out + 1], approx=approx_recip)
        agg = agg_ext[:, :f_out] * inv

        if concat:
            outs.append(agg)
        else:
            acc = agg if acc is None else acc + agg

    if concat:
        out = jnp.concatenate(outs, axis=-1) + bias_ref[...]             # one wide store
        if apply_elu:
            out = jnp.where(out > 0.0, out, jnp.exp(out) - 1.0)          # F.elu
        out_ref[...] = out
    else:
        out = acc / jnp.float32(heads) + bias_ref[...]
        if apply_elu:
            out = jnp.where(out > 0.0, out, jnp.exp(out) - 1.0)
        if apply_log_softmax:
            z = out - jnp.max(out, axis=-1, keepdims=True)
            out = z - jnp.log(jnp.sum(jnp.exp(z), axis=-1, keepdims=True))
        out_ref[...] = out


# ------------------------------ layer wrapper ----------------------------------


def gat_layer(x_pad, adj_pad_i8, w, att_src, att_dst, bias, *, heads, f_out,
              concat, apply_elu=False, apply_log_softmax=False, tile,
              nsq_dtype=jnp.bfloat16, approx_recip=True,
              vmem_limit=48 * 1024 * 1024):
    n_pad, fin = x_pad.shape
    d = heads * f_out
    d_out = d if concat else f_out
    d_ext = d + 2 * heads
    num_tiles = n_pad // tile

    w_ext = _extended_weights(w, att_src, att_dst)                       # [Fin, H*F + 2H]

    # --- kernel 1: fused node transform + attention-score projections ----------
    h_ext = pl.pallas_call(
        _gat_transform_kernel,
        out_shape=jax.ShapeDtypeStruct((n_pad, d_ext), jnp.float32),
        grid=(num_tiles,),
        in_specs=[pl.BlockSpec((tile, fin), lambda i: (i, 0)),
                  _invariant_spec((fin, d_ext), lambda i: (0, 0))],
        out_specs=pl.BlockSpec((tile, d_ext), lambda i: (i, 0)),
        compiler_params=pltpu.CompilerParams(
            dimension_semantics=("parallel",),
            vmem_limit_bytes=vmem_limit),
    )(x_pad, w_ext)

    # Tiny XLA glue between the two pallas_calls: split h_ext and bake a per-head
    # ones column into h_aug so p @ h_aug also produces row-sum(p).
    h_all = h_ext[:, :d]                                                 # [N, H*F]
    s_src = jnp.transpose(h_ext[:, d:d + heads])                         # [H, N]
    s_dst = h_ext[:, d + heads:d + 2 * heads]                            # [N, H]
    ones = jnp.ones((n_pad, heads, 1), jnp.float32)
    h_aug = jnp.concatenate([h_all.reshape(n_pad, heads, f_out), ones], axis=-1)
    h_aug = h_aug.reshape(n_pad, heads * (f_out + 1)).astype(nsq_dtype)

    # --- kernel 2: masked softmax attention, tiled over destination rows -------
    kernel = functools.partial(
        _gat_attention_kernel, heads=heads, f_out=f_out, concat=concat,
        apply_elu=apply_elu, apply_log_softmax=apply_log_softmax,
        approx_recip=approx_recip)
    out = pl.pallas_call(
        kernel,
        out_shape=jax.ShapeDtypeStruct((n_pad, d_out), jnp.float32),
        grid=(num_tiles,),
        in_specs=[pl.BlockSpec((tile, n_pad), lambda i: (i, 0)),         # int8 adjacency tile
                  _invariant_spec((n_pad, heads * (f_out + 1)),          # h_aug (all sources)
                                  lambda i: (0, 0)),
                  _invariant_spec((heads, n_pad), lambda i: (0, 0)),     # source scores [H, N]
                  pl.BlockSpec((tile, heads), lambda i: (i, 0)),         # dest scores tile
                  _invariant_spec((1, d_out), lambda i: (0, 0))],        # bias
        out_specs=pl.BlockSpec((tile, d_out), lambda i: (i, 0)),
        compiler_params=pltpu.CompilerParams(
            dimension_semantics=("parallel",),
            vmem_limit_bytes=vmem_limit),
    )(adj_pad_i8, h_aug, s_src, s_dst, bias)
    return out


# ------------------------------ Net_gat forward --------------------------------


def net_gat_forward(x, adj, params, *, nsq_dtype=jnp.bfloat16):
    n, fin = x.shape
    max_tile, vmem_budget = _tpu_generation_budget()
    nsq_bytes = jnp.dtype(nsq_dtype).itemsize

    # Pad nodes to a multiple of 128 (dense lane slabs) and pick the biggest
    # destination-row tile whose attention working set fits the VMEM budget.
    n_pad = _round_up(max(n, 1), 128)
    tile = _largest_tile(n_pad, max_tile)
    while tile > 128 and _attention_footprint(tile, n_pad, 8, 8, 64, nsq_bytes) > vmem_budget:
        tile = _largest_tile(n_pad, tile - 128)

    # Padded sources are masked out (zero adjacency); padded destination rows are
    # garbage-but-finite and sliced off below.
    x_pad = jnp.zeros((n_pad, fin), jnp.float32).at[:n, :].set(x.astype(jnp.float32))
    adj_i8 = jnp.zeros((n_pad, n_pad), jnp.int8).at[:n, :n].set((adj > 0).astype(jnp.int8))

    # F.dropout(p=0.6) is identity in eval mode.
    x1_pad = gat_layer(x_pad, adj_i8, params["w1"], params["att_src1"],
                       params["att_dst1"], params["bias1"], heads=8, f_out=8,
                       concat=True, apply_elu=True, tile=tile,
                       nsq_dtype=nsq_dtype, approx_recip=True,
                       vmem_limit=vmem_budget)                       # elu(conv1(x)) -> [N,64]
    num_classes = params["bias2"].shape[-1]
    logp_pad = gat_layer(x1_pad, adj_i8, params["w2"], params["att_src2"],
                         params["att_dst2"], params["bias2"], heads=1,
                         f_out=num_classes, concat=False,
                         apply_log_softmax=True, tile=tile,
                         nsq_dtype=nsq_dtype, approx_recip=False,
                         vmem_limit=vmem_budget)                     # log_softmax(conv2(x1))
    return logp_pad[:n], x1_pad[:n]


# ------------------------------ parameter init ---------------------------------


def init_params(key, in_channels, num_classes, hidden=8, heads=8):
    ks = jax.random.split(key, 6)

    def glorot(k, shape, fan_in, fan_out):
        lim = jnp.sqrt(6.0 / (fan_in + fan_out))
        return jax.random.uniform(k, shape, jnp.float32, -lim, lim)

    return dict(
        w1=glorot(ks[0], (heads, in_channels, hidden), in_channels, heads * hidden),
        att_src1=glorot(ks[1], (heads, 1, hidden), hidden, 1),
        att_dst1=glorot(ks[2], (heads, 1, hidden), hidden, 1),
        bias1=jnp.zeros((1, heads * hidden), jnp.float32),
        w2=glorot(ks[3], (1, heads * hidden, num_classes), heads * hidden, num_classes),
        att_src2=glorot(ks[4], (1, 1, num_classes), num_classes, 1),
        att_dst2=glorot(ks[5], (1, 1, num_classes), num_classes, 1),
        bias2=jnp.zeros((1, num_classes), jnp.float32),
    )


# ------------------------------ pure-JAX reference -----------------------------


def _gat_conv_ref(x, adj, w3, att_src, att_dst, bias, heads, concat):
    mask = adj > 0.0
    outs = []
    for hd in range(heads):
        h = jnp.dot(x, w3[hd], precision="highest")
        a_s = jnp.sum(h * att_src[hd], axis=-1, keepdims=True)   # [N, 1]
        a_d = jnp.sum(h * att_dst[hd], axis=-1, keepdims=True)   # [N, 1]
        e = a_d + a_s.T
        e = jnp.where(e >= 0.0, e, 0.2 * e)
        e = jnp.where(mask, e, -1e30)
        e = e - jnp.max(e, axis=1, keepdims=True)
        p = jnp.where(mask, jnp.exp(e), 0.0)
        alpha = p / jnp.sum(p, axis=1, keepdims=True)
        outs.append(jnp.dot(alpha, h, precision="highest"))
    out = jnp.concatenate(outs, -1) if concat else sum(outs) / float(heads)
    return out + bias


# ------------------------------------ main --------------------------------------


if __name__ == "__main__":
    key = jax.random.PRNGKey(0)
    N, FIN, NUM_CLASSES, E = 300, 32, 6, 900   # small, but exercises padding/tiling

    kx, ke, kp = jax.random.split(key, 3)
    x = jax.random.normal(kx, (N, FIN), jnp.float32)

    k_src, k_dst = jax.random.split(ke)
    src = jax.random.randint(k_src, (E,), 0, N)
    dst = jax.random.randint(k_dst, (E,), 0, N)

    # dense adjacency + self-loops (GATConv default add_self_loops=True)
    adj = jnp.zeros((N, N), jnp.float32).at[dst, src].set(1.0)
    adj = jnp.maximum(adj, jnp.eye(N, dtype=jnp.float32))

    params = init_params(kp, FIN, NUM_CLASSES)

    # pure-JAX reference (eval-mode forward)
    x1_ref = jax.nn.elu(_gat_conv_ref(x, adj, params["w1"], params["att_src1"],
                                      params["att_dst1"], params["bias1"], 8, True))
    logits_ref = _gat_conv_ref(x1_ref, adj, params["w2"], params["att_src2"],
                               params["att_dst2"], params["bias2"], 1, False)
    logp_ref = jax.nn.log_softmax(logits_ref, axis=-1)

    # 1) default configuration: bf16 aggregation on the N^2 path (perf mode).
    log_probs, x1 = jax.block_until_ready(net_gat_forward(x, adj, params))
    assert log_probs.shape == (N, NUM_CLASSES) and x1.shape == (N, 64)
    assert bool(jnp.all(jnp.isfinite(log_probs))) and bool(jnp.all(jnp.isfinite(x1)))
    # bf16 p/h in the aggregation matmul -> ~1e-2-scale rounding; looser tolerance here.
    assert jnp.allclose(x1, x1_ref, atol=3e-2, rtol=3e-2)
    assert jnp.allclose(log_probs, logp_ref, atol=3e-2, rtol=3e-2)

    # 2) strict f32 N^2 path (same kernels, nsq_dtype=f32): tight tolerance.
    log_probs32, x1_32 = jax.block_until_ready(
        net_gat_forward(x, adj, params, nsq_dtype=jnp.float32))
    assert bool(jnp.all(jnp.isfinite(log_probs32))) and bool(jnp.all(jnp.isfinite(x1_32)))
    # 5e-3: approx EUP reciprocal in layer-1 normalization + MXU accumulation.
    assert jnp.allclose(x1_32, x1_ref, atol=5e-3, rtol=5e-3)
    assert jnp.allclose(log_probs32, logp_ref, atol=5e-3, rtol=5e-3)

    print("KERNEL_OK")
</pallas_src>

<mosaic_0001>
module attributes {stable_mosaic.version = 11 : i64} {
  func.func @_probe_kernel(%arg0: i32, %arg1: memref<8x128xf32, #tpu.memory_space<vmem>>, %arg2: memref<8x128xf32, #tpu.memory_space<vmem>>) attributes {dimension_semantics = [#tpu.dimension_semantics<arbitrary>], iteration_bounds = array<i64: 1>, scalar_prefetch = 0 : i64, scratch_operands = 0 : i64, tpu.core_type = #tpu.core_type<tc>, window_params = [{pipeline_mode = #tpu.pipeline_mode<synchronous>, transform_indices = @transform_0, window_bounds = array<i64: 8, 128>}, {pipeline_mode = #tpu.pipeline_mode<synchronous>, transform_indices = @transform_1, window_bounds = array<i64: 8, 128>}]} {
    %c0 = arith.constant 0 : index
    %c0_0 = arith.constant 0 : index
    %0 = vector.load %arg1[%c0, %c0_0] : memref<8x128xf32, #tpu.memory_space<vmem>>, vector<8x128xf32>
    %c0_1 = arith.constant 0 : index
    %c0_2 = arith.constant 0 : index
    %1 = vector.load %arg2[%c0_1, %c0_2] : memref<8x128xf32, #tpu.memory_space<vmem>>, vector<8x128xf32>
    tpu.vector_store %arg2[%c0_1, %c0_2], %0 {strides = array<i32>} : memref<8x128xf32, #tpu.memory_space<vmem>>, vector<8x128xf32>,
    return
  }
  func.func @transform_0(%arg0: i32) -> (i32, i32) {
    %c0_i32 = arith.constant 0 : i32
    %c0_i32_0 = arith.constant 0 : i32
    %c0_i32_1 = arith.constant 0 : i32
    return %c0_i32, %c0_i32_0 : i32, i32
  }
  func.func @transform_1(%arg0: i32) -> (i32, i32) {
    %c0_i32 = arith.constant 0 : i32
    %c0_i32_0 = arith.constant 0 : i32
    %c0_i32_1 = arith.constant 0 : i32
    return %c0_i32, %c0_i32_0 : i32, i32
  }
}

module attributes {stable_mosaic.version = 11 : i64} {
  func.func @_gat_transform_kernel(%arg0: i32, %arg1: memref<128x32xf32, #tpu.memory_space<vmem>>, %arg2: memref<32x80xf32, #tpu.memory_space<vmem>>, %arg3: memref<128x80xf32, #tpu.memory_space<vmem>>) attributes {dimension_semantics = [#tpu.dimension_semantics<parallel>], iteration_bounds = array<i64: 3>, scalar_prefetch = 0 : i64, scratch_operands = 0 : i64, tpu.core_type = #tpu.core_type<tc>, window_params = [{transform_indices = @transform_0, window_bounds = array<i64: 128, 32>}, {pipeline_mode = #tpu.pipeline_mode<synchronous>, transform_indices = @transform_1, window_bounds = array<i64: 32, 80>}, {transform_indices = @transform_2, window_bounds = array<i64: 128, 80>}]} {
    %c0 = arith.constant 0 : index
    %c0_0 = arith.constant 0 : index
    %0 = vector.load %arg1[%c0, %c0_0] : memref<128x32xf32, #tpu.memory_space<vmem>>, vector<128x32xf32>
    %c0_1 = arith.constant 0 : index
    %c0_2 = arith.constant 0 : index
    %1 = vector.load %arg2[%c0_1, %c0_2] : memref<32x80xf32, #tpu.memory_space<vmem>>, vector<32x80xf32>
    %cst = arith.constant dense<0.000000e+00> : vector<128x80xf32>
    %2 = tpu.matmul %0, %1, %cst {dimension_numbers = #tpu.dot_dimension_numbers<[1], [0], [0], [1], [0, 0, 1, 1], [], []>} : vector<128x32xf32>, vector<32x80xf32>, vector<128x80xf32> -> vector<128x80xf32>
    %c0_3 = arith.constant 0 : index
    %c0_4 = arith.constant 0 : index
    %3 = vector.load %arg3[%c0_3, %c0_4] : memref<128x80xf32, #tpu.memory_space<vmem>>, vector<128x80xf32>
    tpu.vector_store %arg3[%c0_3, %c0_4], %2 {strides = array<i32>} : memref<128x80xf32, #tpu.memory_space<vmem>>, vector<128x80xf32>,
    return
  }
  func.func @transform_0(%arg0: i32) -> (i32, i32) {
    %c0_i32 = arith.constant 0 : i32
    %c0_i32_0 = arith.constant 0 : i32
    return %arg0, %c0_i32 : i32, i32
  }
  func.func @transform_1(%arg0: i32) -> (i32, i32) {
    %c0_i32 = arith.constant 0 : i32
    %c0_i32_0 = arith.constant 0 : i32
    %c0_i32_1 = arith.constant 0 : i32
    return %c0_i32, %c0_i32_0 : i32, i32
  }
  func.func @transform_2(%arg0: i32) -> (i32, i32) {
    %c0_i32 = arith.constant 0 : i32
    %c0_i32_0 = arith.constant 0 : i32
    return %arg0, %c0_i32 : i32, i32
  }
}

</mosaic_0001>

<llo_original>
// kernel: tpu_custom_call.1
$region0: #{tpu_custom_call.1}
  #allocation0 [shape = 'u32[]', space=smem, size = 0x4, offset = 0x4, fixed_abs, tag = 'smem constant byte address 0x4 - core index']
  #allocation1 [shape = 'u32[144,128]{1,0:T(1,128)}', space=vmem, size = 0x12000, scoped, tag = 'internal scratch']
  %s0 = inlined_call_operand.hbm [shape: f32[8,128], index: 0, kind: input, shape index: {}]
  %s1 = inlined_call_operand.hbm [shape: f32[8,128], index: 1, kind: output, shape index: {}]
  %s2 = sld [smem:[#allocation0]]
  $region18: #{tpu_custom_call.1} parent=0
    _
  %s4 = ssub.s32 1, %s2
  %s5 = scalar_select 0, %s4, %s2
  $region1: #{tpu_custom_call.1} parent=0
    #allocation2 [shape = 'u8[4096]{0}', space=vmem, size = 0x1000, scoped, tag = 'input window, operand 0, single buffered']
    #allocation3 [shape = 's32[1]{0}', space=sflag, size = 0x4, scoped, tag = 'scoped memory for tpu_custom_call.1']
    #allocation4 [shape = 's32[1]{0}', space=sflag, size = 0x4, scoped, tag = 'scoped memory for tpu_custom_call.1']
    #allocation5 [shape = 'u8[4096]{0}', space=vmem, size = 0x1000, scoped, tag = 'output window, operand 0, single buffered']
    %6 = vsyncpa [#allocation3], 0
    %7 = vsyncpa [#allocation4], 0
    // Predicated region
    $region2: #{tpu_custom_call.1} parent=1 // pred_check
      _
    $region3: #{tpu_custom_call.1} parent=1 // pred_check_branch
      %9 = sbr.rel (0) target = $region5
    $region4: #{tpu_custom_call.1} parent=1 // pred_region
      %s11 = ssub.s32 128, 128
      %12 = vsyncadd [#allocation3], %s11
      %s14 = sshll.u32 [#allocation2], 4
      %s15 = int_to_ptr.vmem [resolvable:$true] %s14
      %17 = dma.hbm_to_vmem [thread:$0]  %s0, 128, %s15, [#allocation3]
    $region5: #{tpu_custom_call.1} parent=1 // pred_fallthru
      _
    // Predicated region
    $region6: #{tpu_custom_call.1} parent=1 // pred_check
      _
    $region7: #{tpu_custom_call.1} parent=1 // pred_check_branch
      %19 = sbr.rel (0) target = $region9
    $region8: #{tpu_custom_call.1} parent=1 // pred_region
      %20 = dma.done [#allocation3], 128
    $region9: #{tpu_custom_call.1} parent=1 // pred_fallthru
      _
    %v21 = vld [vmem:[#allocation2] sm:$0xff]
    %22 = vst [vmem:[#allocation5] sm:$0xff] %v21
    // Predicated region
    $region10: #{tpu_custom_call.1} parent=1 // pred_check
      _
    $region11: #{tpu_custom_call.1} parent=1 // pred_check_branch
      %24 = sbr.rel (0) target = $region13
    $region12: #{tpu_custom_call.1} parent=1 // pred_region
      %s26 = ssub.s32 128, 128
      %27 = vsyncadd [#allocation4], %s26
      %s29 = sshll.u32 [#allocation5], 4
      %s30 = int_to_ptr.vmem [resolvable:$true] %s29
      %32 = dma.vmem_to_hbm [thread:$0]  %s30, 128, %s1, [#allocation4]
    $region13: #{tpu_custom_call.1} parent=1 // pred_fallthru
      _
    // Predicated region
    $region14: #{tpu_custom_call.1} parent=1 // pred_check
      _
    $region15: #{tpu_custom_call.1} parent=1 // pred_check_branch
      %34 = sbr.rel (0) target = $region17
    $region16: #{tpu_custom_call.1} parent=1 // pred_region
      %35 = dma.done [#allocation4], 128
    $region17: #{tpu_custom_call.1} parent=1 // pred_fallthru
      _
    %36 = vsyncpa [#allocation3], 1
    %37 = vsyncpa [#allocation4], 1

// kernel: tpu_custom_call.1
$region0: #{tpu_custom_call.1}
  #allocation0 [shape = 'u32[]', space=smem, size = 0x4, offset = 0x4, fixed_abs, tag = 'smem constant byte address 0x4 - core index']
  #allocation1 [shape = 'u32[144,128]{1,0:T(1,128)}', space=vmem, size = 0x12000, scoped, tag = 'internal scratch']
  %s0 = inlined_call_operand.vmem [shape: f32[384,32], index: 0, kind: input, shape index: {}]
  %s1 = inlined_call_operand.vmem [shape: f32[32,80], index: 1, kind: input, shape index: {}]
  %s2 = inlined_call_operand.vmem [shape: f32[384,80], index: 2, kind: output, shape index: {}]
  %s3 = sld [smem:[#allocation0]]
  $region41: #{tpu_custom_call.1} parent=0
    _
  %s5 = ssub.s32 1, %s3
  %s6 = scalar_select 0, %s5, %s3
  loop: start=0, step=1, limit=5
  $region2: #{tpu_custom_call.1} parent=0 // loop_pre_header
    _
  $region3: #{tpu_custom_call.1} parent=0 // loop_header
    %s8 = sphi 0, %s12
    %p9 = scmp.ge.s32.totalorder %s8, 5
    %s18 = sphi 0, %s20
    %s21 = sphi 0, %s18
    %s22 = sphi 0, %s21
    %s38 = sphi 0, %s22
    %s42 = sphi 0, %s42
    %s44 = sphi 0, %s42
    %s45 = sphi 0, %s44
    %s59 = sphi 0, %s45
    %s65 = sphi 0, %s67
    %s68 = sphi 0, %s65
    %s69 = sphi 0, %s68
    %s85 = sphi 0, %s69
  $region4: #{tpu_custom_call.1} parent=0 // loop_header_branch
    %11 = sbr.rel (%p9) target = $region8
  $region5: #{tpu_custom_call.1} parent=0 // loop_body
    %s13 = ssub.s32 %s8, 1
    %s14 = ssub.s32 %s8, 2
    %s15 = sadd.s32 %s8, 1
    %s16 = ssub.s32 %s8, %s15
    %p17 = scmp.eq.s32.totalorder %s16, 0
    %s19 = sadd.s32 %s18, 1
    %s20 = scalar_select %p17, %s18, %s19
    %p23 = pneg %p17
    %p24 = scmp.eq.s32.totalorder %s8, 2
    %p25 = por %p23, %p24
    %p26 = scmp.ne.s32.totalorder %s18, %s21
    %p27 = scmp.eq.s32.totalorder %s8, 0
    %p28 = por %p26, %p27
    %p29 = scmp.ne.s32.totalorder %s18, %s21
    %p30 = scmp.eq.s32.totalorder %s13, 2
    %p31 = por %p29, %p30
    %p32 = scmp.ne.s32.totalorder %s21, %s22
    %p33 = scmp.eq.s32.totalorder %s13, 0
    %p34 = por %p32, %p33
    %p35 = scmp.ne.s32.totalorder %s21, %s22
    %p36 = scmp.eq.s32.totalorder %s14, 2
    %p37 = por %p35, %p36
    %p39 = scmp.ne.s32.totalorder %s22, %s38
    %p40 = scmp.eq.s32.totalorder %s14, 0
    %p41 = por %p39, %p40
    %s43 = sadd.s32 %s42, 1
    %p46 = scmp.eq.s32.totalorder %s8, 2
    %p47 = scmp.ne.s32.totalorder %s42, %s44
    %p48 = scmp.eq.s32.totalorder %s8, 0
    %p49 = por %p47, %p48
    %p50 = scmp.ne.s32.totalorder %s42, %s44
    %p51 = scmp.eq.s32.totalorder %s13, 2
    %p52 = por %p50, %p51
    %p53 = scmp.ne.s32.totalorder %s44, %s45
    %p54 = scmp.eq.s32.totalorder %s13, 0
    %p55 = por %p53, %p54
    %p56 = scmp.ne.s32.totalorder %s44, %s45
    %p57 = scmp.eq.s32.totalorder %s14, 2
    %p58 = por %p56, %p57
    %p60 = scmp.ne.s32.totalorder %s45, %s59
    %p61 = scmp.eq.s32.totalorder %s14, 0
    %p62 = por %p60, %p61
    %s63 = ssub.s32 %s8, %s15
    %p64 = scmp.eq.s32.totalorder %s63, 0
    %s66 = sadd.s32 %s65, 1
    %s67 = scalar_select %p64, %s65, %s66
    %p70 = pneg %p64
    %p71 = scmp.eq.s32.totalorder %s8, 2
    %p72 = por %p70, %p71
    %p73 = scmp.ne.s32.totalorder %s65, %s68
    %p74 = scmp.eq.s32.totalorder %s8, 0
    %p75 = por %p73, %p74
    %p76 = scmp.ne.s32.totalorder %s65, %s68
    %p77 = scmp.eq.s32.totalorder %s13, 2
    %p78 = por %p76, %p77
    %p79 = scmp.ne.s32.totalorder %s68, %s69
    %p80 = scmp.eq.s32.totalorder %s13, 0
    %p81 = por %p79, %p80
    %p82 = scmp.ne.s32.totalorder %s68, %s69
    %p83 = scmp.eq.s32.totalorder %s14, 2
    %p84 = por %p82, %p83
    %p86 = scmp.ne.s32.totalorder %s69, %s85
    %p87 = scmp.eq.s32.totalorder %s14, 0
    %p88 = por %p86, %p87
    %p89 = scmp.le.s32.totalorder 1, %s8
    %p90 = scmp.lt.s32.totalorder %s8, 4
    %p91 = pnand %p89, %p90
    %p92 = pneg %p91
    // Predicated region
    $region9: #{tpu_custom_call.1} parent=5 // pred_check
      _
    $region10: #{tpu_custom_call.1} parent=5 // pred_check_branch
      %94 = sbr.rel (%p91) target = $region12
    $region11: #{tpu_custom_call.1} parent=5 // pred_region
      %s95 = ssub.s32 %s8, 1
      // Predicated region
      $region13: #{tpu_custom_call.1} parent=11 // pred_check
        %p96 = pneg %p55
      $region14: #{tpu_custom_call.1} parent=11 // pred_check_branch
        %98 = sbr.rel (%p96) target = $region16
      $region15: #{tpu_custom_call.1} parent=11 // pred_region
        _
      $region16: #{tpu_custom_call.1} parent=11 // pred_fallthru
        _
    $region12: #{tpu_custom_call.1} parent=5 // pred_fallthru
      _
    %p99 = scmp.lt.s32.totalorder %s8, 3
    // Predicated region
    $region17: #{tpu_custom_call.1} parent=5 // pred_check
      %p100 = pneg %p99
    $region18: #{tpu_custom_call.1} parent=5 // pred_check_branch
      %102 = sbr.rel (%p100) target = $region20
    $region19: #{tpu_custom_call.1} parent=5 // pred_region
      // Predicated region
      $region21: #{tpu_custom_call.1} parent=19 // pred_check
        %p103 = pneg %p28
      $region22: #{tpu_custom_call.1} parent=19 // pred_check_branch
        %105 = sbr.rel (%p103) target = $region24
      $region23: #{tpu_custom_call.1} parent=19 // pred_region
        %s106 = smul.u32 16, %s8
        %p107 = scmp.lt.s32.totalorder %s106, 47
        %s108 = scalar_select %p107, %s106, 47
        %s109 = smul.addr %s108, 8
        %s110 = scalar_lea.vmem %s0, %s109
        %s111 = smul.u32 16, %s8
      $region24: #{tpu_custom_call.1} parent=19 // pred_fallthru
        _
    $region20: #{tpu_custom_call.1} parent=5 // pred_fallthru
      _
    %p112 = scmp.le.s32.totalorder 1, %s8
    %p113 = scmp.lt.s32.totalorder %s8, 4
    %p114 = pnand %p112, %p113
    %p115 = pneg %p114
    // Predicated region
    $region25: #{tpu_custom_call.1} parent=5 // pred_check
      _
    $region26: #{tpu_custom_call.1} parent=5 // pred_check_branch
      %117 = sbr.rel (%p114) target = $region28
    $region27: #{tpu_custom_call.1} parent=5 // pred_region
      %s118 = ssub.s32 %s8, 1
      %s119 = smul.u32 16, %s13
      %p120 = scmp.lt.s32.totalorder %s119, 47
      %s121 = scalar_select %p120, %s119, 47
      %s122 = smul.addr %s121, 8
      %s123 = scalar_lea.vmem %s0, %s122
      %p124 = pneg %p34
      %p125 = pneg %p31
      %p126 = pneg %p55
      %p127 = pneg %p52
      %p128 = pneg %p81
      %p129 = pneg %p78
      %s130 = smul.u32 16, %s13
      %p131 = scmp.lt.s32.totalorder %s130, 47
      %s132 = scalar_select %p131, %s130, 47
      %s133 = smul.addr %s132, 8
      %s134 = scalar_lea.vmem %s2, %s133
      %s135 = smul.u32 16, %s13
      %p136 = scmp.lt.s32.totalorder %s135, 47
      %s137 = scalar_select %p136, %s135, 47
      %s138 = smul.addr %s137, 8
      %s139 = scalar_lea.vmem %s0, %s138
      %s140 = smul.u32 16, %s13
      %s141 = smul.u32 16, %s13
      %p142 = scmp.lt.s32.totalorder %s141, 47
      %s143 = scalar_select %p142, %s141, 47
      %s144 = smul.addr %s143, 8
      %s145 = scalar_lea.vmem %s2, %s144
      %s146 = smul.u32 16, %s13
      %v147 = vld [vmem:[%s139] sm:$0xff]
      %v148 = vld [vmem:[%s139 + $0x8] sm:$0xff]
      %v149 = vld [vmem:[%s139 + $0x10] sm:$0xff]
      %v150 = vld [vmem:[%s139 + $0x18] sm:$0xff]
      %v151 = vld [vmem:[%s139 + $0x20] sm:$0xff]
      %v152 = vld [vmem:[%s139 + $0x28] sm:$0xff]
      %v153 = vld [vmem:[%s139 + $0x30] sm:$0xff]
      %v154 = vld [vmem:[%s139 + $0x38] sm:$0xff]
      %v155 = vld [vmem:[%s139 + $0x40] sm:$0xff]
      %v156 = vld [vmem:[%s139 + $0x48] sm:$0xff]
      %v157 = vld [vmem:[%s139 + $0x50] sm:$0xff]
      %v158 = vld [vmem:[%s139 + $0x58] sm:$0xff]
      %v159 = vld [vmem:[%s139 + $0x60] sm:$0xff]
      %v160 = vld [vmem:[%s139 + $0x68] sm:$0xff]
      %v161 = vld [vmem:[%s139 + $0x70] sm:$0xff]
      %v162 = vld [vmem:[%s139 + $0x78] sm:$0xff]
      %v163 = vld [vmem:[%s1] sm:$0xff]
      %v164 = vld [vmem:[%s1 + $0x8] sm:$0xff]
      %v165 = vld [vmem:[%s1 + $0x10] sm:$0xff]
      %v166 = vld [vmem:[%s1 + $0x18] sm:$0xff]
      %vm167 = vcmask 261120
      %v169 = vsel %vm167, %v147, 0
      %v172 = vsel %vm167, %v148, 0
      %v175 = vsel %vm167, %v149, 0
      %v178 = vsel %vm167, %v150, 0
      %v181 = vsel %vm167, %v151, 0
      %v184 = vsel %vm167, %v152, 0
      %v187 = vsel %vm167, %v153, 0
      %v190 = vsel %vm167, %v154, 0
      %v193 = vsel %vm167, %v155, 0
      %v196 = vsel %vm167, %v156, 0
      %v199 = vsel %vm167, %v157, 0
      %v202 = vsel %vm167, %v158, 0
      %v205 = vsel %vm167, %v159, 0
      %v208 = vsel %vm167, %v160, 0
      %v211 = vsel %vm167, %v161, 0
      %v214 = vsel %vm167, %v162, 0
      %216 = vmatprep.subr.mxu0 0.0
      %217 = vmatpush1.msra.mxu0 %v163
      %218 = vmatprep.subr.mxu0 0.0
      %219 = vmatpush1.msra.mxu0 %v164
      %220 = vmatprep.subr.mxu0 0.0
      %221 = vmatpush1.msra.mxu0 %v165
      %222 = vmatprep.subr.mxu0 0.0
      %223 = vmatpush1.msra.mxu0 %v166
      %224 = vmatprep.subr.mxu0 0.0
      %225 = vmatpush1.msra.mxu0 0.0
      %226 = vmatprep.subr.mxu0 0.0
      %227 = vmatpush1.msra.mxu0 0.0
      %228 = vmatprep.subr.mxu0 0.0
      %229 = vmatpush1.msra.mxu0 0.0
      %230 = vmatprep.subr.mxu0 0.0
      %231 = vmatpush1.msra.mxu0 0.0
      %232 = vmatprep.subr.mxu0 0.0
      %233 = vmatpush1.msra.mxu0 0.0
      %234 = vmatprep.subr.mxu0 0.0
      %235 = vmatpush1.msra.mxu0 0.0
      %236 = vmatprep.subr.mxu0 0.0
      %237 = vmatpush1.msra.mxu0 0.0
      %238 = vmatprep.subr.mxu0 0.0
      %239 = vmatpush1.msra.mxu0 0.0
      %240 = vmatprep.subr.mxu0 0.0
      %241 = vmatpush1.msra.mxu0 0.0
      %242 = vmatprep.subr.mxu0 0.0
      %243 = vmatpush1.msra.mxu0 0.0
      %244 = vmatprep.subr.mxu0 0.0
      %245 = vmatpush1.msra.mxu0 0.0
      %246 = vmatprep.subr.mxu0 0.0
      %247 = vmatpush1.msra.mxu0 0.0
      %248 = vmatprep.subr.mxu0 0.0
      %249 = vmatpush1.msra.mxu0 0.0
      %250 = vmatprep.subr.mxu0 0.0
      %251 = vmatpush1.msra.mxu0 0.0
      %252 = vmatprep.subr.mxu0 0.0
      %253 = vmatpush1.msra.mxu0 0.0
      %254 = vmatprep.subr.mxu0 0.0
      %255 = vmatpush1.msra.mxu0 0.0
      %256 = vmatprep.subr.mxu0 0.0
      %257 = vmatpush1.msra.mxu0 0.0
      %258 = vmatprep.subr.mxu0 0.0
      %259 = vmatpush1.msra.mxu0 0.0
      %260 = vmatprep.subr.mxu0 0.0
      %261 = vmatpush1.msra.mxu0 0.0
      %262 = vmatprep.subr.mxu0 0.0
      %263 = vmatpush1.msra.mxu0 0.0
      %264 = vmatprep.subr.mxu0 0.0
      %265 = vmatpush1.msra.mxu0 0.0
      %266 = vmatprep.subr.mxu0 0.0
      %267 = vmatpush1.msra.mxu0 0.0
      %268 = vmatprep.subr.mxu0 0.0
      %269 = vmatpush1.msra.mxu0 0.0
      %270 = vmatprep.subr.mxu0 0.0
      %271 = vmatpush1.msra.mxu0 0.0
      %272 = vmatprep.subr.mxu0 0.0
      %273 = vmatpush1.msra.mxu0 0.0
      %274 = vmatprep.subr.mxu0 0.0
      %275 = vmatpush1.msra.mxu0 0.0
      %276 = vmatprep.subr.mxu0 0.0
      %277 = vmatpush1.msra.mxu0 0.0
      %278 = vmatprep.subr.mxu0 0.0
      %279 = vmatpush1.msra.mxu0 0.0
      %280 = vmatprep.mubr.f32.mxu0 0.0
      %281 = vmatmul.mubr.f32.gmra.mrb[0].mxu0 %v169
      %v282 = vpop.f32.mrb[0].mxu0
      %v283 = vadd.f32 0.0, %v282
      %v284 = vpop.f32.mrb[0].mxu0
      %285 = vmatprep.mubr.f32.mxu0 0.0
      %286 = vmatmul.mubr.f32.gmra.mrb[0].mxu0 %v172
      %v287 = vpop.f32.mrb[0].mxu0
      %v288 = vadd.f32 0.0, %v287
      %v289 = vpop.f32.mrb[0].mxu0
      %290 = vmatprep.mubr.f32.mxu0 0.0
      %291 = vmatmul.mubr.f32.gmra.mrb[0].mxu0 %v175
      %v292 = vpop.f32.mrb[0].mxu0
      %v293 = vadd.f32 0.0, %v292
      %v294 = vpop.f32.mrb[0].mxu0
      %295 = vmatprep.mubr.f32.mxu0 0.0
      %296 = vmatmul.mubr.f32.gmra.mrb[0].mxu0 %v178
      %v297 = vpop.f32.mrb[0].mxu0
      %v298 = vadd.f32 0.0, %v297
      %v299 = vpop.f32.mrb[0].mxu0
      %300 = vmatprep.mubr.f32.mxu0 0.0
      %301 = vmatmul.mubr.f32.gmra.mrb[0].mxu0 %v181
      %v302 = vpop.f32.mrb[0].mxu0
      %v303 = vadd.f32 0.0, %v302
      %v304 = vpop.f32.mrb[0].mxu0
      %305 = vmatprep.mubr.f32.mxu0 0.0
      %306 = vmatmul.mubr.f32.gmra.mrb[0].mxu0 %v184
      %v307 = vpop.f32.mrb[0].mxu0
      %v308 = vadd.f32 0.0, %v307
      %v309 = vpop.f32.mrb[0].mxu0
      %310 = vmatprep.mubr.f32.mxu0 0.0
      %311 = vmatmul.mubr.f32.gmra.mrb[0].mxu0 %v187
      %v312 = vpop.f32.mrb[0].mxu0
      %v313 = vadd.f32 0.0, %v312
      %v314 = vpop.f32.mrb[0].mxu0
      %315 = vmatprep.mubr.f32.mxu0 0.0
      %316 = vmatmul.mubr.f32.gmra.mrb[0].mxu0 %v190
      %v317 = vpop.f32.mrb[0].mxu0
      %v318 = vadd.f32 0.0, %v317
      %v319 = vpop.f32.mrb[0].mxu0
      %320 = vmatprep.mubr.f32.mxu0 0.0
      %321 = vmatmul.mubr.f32.gmra.mrb[0].mxu0 %v193
      %v322 = vpop.f32.mrb[0].mxu0
      %v323 = vadd.f32 0.0, %v322
      %v324 = vpop.f32.mrb[0].mxu0
      %325 = vmatprep.mubr.f32.mxu0 0.0
      %326 = vmatmul.mubr.f32.gmra.mrb[0].mxu0 %v196
      %v327 = vpop.f32.mrb[0].mxu0
      %v328 = vadd.f32 0.0, %v327
      %v329 = vpop.f32.mrb[0].mxu0
      %330 = vmatprep.mubr.f32.mxu0 0.0
      %331 = vmatmul.mubr.f32.gmra.mrb[0].mxu0 %v199
      %v332 = vpop.f32.mrb[0].mxu0
      %v333 = vadd.f32 0.0, %v332
      %v334 = vpop.f32.mrb[0].mxu0
      %335 = vmatprep.mubr.f32.mxu0 0.0
      %336 = vmatmul.mubr.f32.gmra.mrb[0].mxu0 %v202
      %v337 = vpop.f32.mrb[0].mxu0
      %v338 = vadd.f32 0.0, %v337
      %v339 = vpop.f32.mrb[0].mxu0
      %340 = vmatprep.mubr.f32.mxu0 0.0
      %341 = vmatmul.mubr.f32.gmra.mrb[0].mxu0 %v205
      %v342 = vpop.f32.mrb[0].mxu0
      %v343 = vadd.f32 0.0, %v342
      %v344 = vpop.f32.mrb[0].mxu0
      %345 = vmatprep.mubr.f32.mxu0 0.0
      %346 = vmatmul.mubr.f32.gmra.mrb[0].mxu0 %v208
      %v347 = vpop.f32.mrb[0].mxu0
      %v348 = vadd.f32 0.0, %v347
      %v349 = vpop.f32.mrb[0].mxu0
      %350 = vmatprep.mubr.f32.mxu0 0.0
      %351 = vmatmul.mubr.f32.gmra.mrb[0].mxu0 %v211
      %v352 = vpop.f32.mrb[0].mxu0
      %v353 = vadd.f32 0.0, %v352
      %v354 = vpop.f32.mrb[0].mxu0
      %355 = vmatprep.mubr.f32.mxu0 0.0
      %356 = vmatmul.mubr.f32.gmra.mrb[0].mxu0 %v214
      %v357 = vpop.f32.mrb[0].mxu0
      %v358 = vadd.f32 0.0, %v357
      %v359 = vpop.f32.mrb[0].mxu0
      %360 = vdwg.mxu0
      %vm361 = vcmask 654336
      %362 = vst.msk [vmem:[%s145] sm:$0xff] %vm361, %v283
      %363 = vst.msk [vmem:[%s145 + $0x8] sm:$0xff] %vm361, %v288
      %364 = vst.msk [vmem:[%s145 + $0x10] sm:$0xff] %vm361, %v293
      %365 = vst.msk [vmem:[%s145 + $0x18] sm:$0xff] %vm361, %v298
      %366 = vst.msk [vmem:[%s145 + $0x20] sm:$0xff] %vm361, %v303
      %367 = vst.msk [vmem:[%s145 + $0x28] sm:$0xff] %vm361, %v308
      %368 = vst.msk [vmem:[%s145 + $0x30] sm:$0xff] %vm361, %v313
      %369 = vst.msk [vmem:[%s145 + $0x38] sm:$0xff] %vm361, %v318
      %370 = vst.msk [vmem:[%s145 + $0x40] sm:$0xff] %vm361, %v323
      %371 = vst.msk [vmem:[%s145 + $0x48] sm:$0xff] %vm361, %v328
      %372 = vst.msk [vmem:[%s145 + $0x50] sm:$0xff] %vm361, %v333
      %373 = vst.msk [vmem:[%s145 + $0x58] sm:$0xff] %vm361, %v338
      %374 = vst.msk [vmem:[%s145 + $0x60] sm:$0xff] %vm361, %v343
      %375 = vst.msk [vmem:[%s145 + $0x68] sm:$0xff] %vm361, %v348
      %376 = vst.msk [vmem:[%s145 + $0x70] sm:$0xff] %vm361, %v353
      %377 = vst.msk [vmem:[%s145 + $0x78] sm:$0xff] %vm361, %v358
      %s378 = smul.u32 16, %s13
      %p379 = scmp.lt.s32.totalorder %s378, 47
      %s380 = scalar_select %p379, %s378, 47
      %s381 = smul.addr %s380, 8
      %s382 = scalar_lea.vmem %s2, %s381
      // Predicated region
      $region29: #{tpu_custom_call.1} parent=27 // pred_check
        %p383 = pneg %p78
      $region30: #{tpu_custom_call.1} parent=27 // pred_check_branch
        %385 = sbr.rel (%p383) target = $region32
      $region31: #{tpu_custom_call.1} parent=27 // pred_region
        %s386 = smul.u32 16, %s13
      $region32: #{tpu_custom_call.1} parent=27 // pred_fallthru
        _
    $region28: #{tpu_custom_call.1} parent=5 // pred_fallthru
      _
    %p387 = scmp.le.s32.totalorder 2, %s8
    // Predicated region
    $region33: #{tpu_custom_call.1} parent=5 // pred_check
      %p388 = pneg %p387
    $region34: #{tpu_custom_call.1} parent=5 // pred_check_branch
      %390 = sbr.rel (%p388) target = $region36
    $region35: #{tpu_custom_call.1} parent=5 // pred_region
      %s391 = ssub.s32 %s8, 2
      // Predicated region
      $region37: #{tpu_custom_call.1} parent=35 // pred_check
        %p392 = pneg %p84
      $region38: #{tpu_custom_call.1} parent=35 // pred_check_branch
        %394 = sbr.rel (%p392) target = $region40
      $region39: #{tpu_custom_call.1} parent=35 // pred_region
        %s395 = smul.u32 16, %s14
        %p396 = scmp.lt.s32.totalorder %s395, 47
        %s397 = scalar_select %p396, %s395, 47
        %s398 = smul.addr %s397, 8
        %s399 = scalar_lea.vmem %s2, %s398
      $region40: #{tpu_custom_call.1} parent=35 // pred_fallthru
        _
    $region36: #{tpu_custom_call.1} parent=5 // pred_fallthru
      _
  $region6: #{tpu_custom_call.1} parent=0 // loop_footer
    %s12 = sadd.s32 1, %s8
  $region7: #{tpu_custom_call.1} parent=0 // loop_footer_branch
    %7 = sbr.rel target = $region3
  $region8: #{tpu_custom_call.1} parent=0 // loop_exit
    _

</llo_original>
